<compile_context>
chip_gen: v7x
topology: tpu7x:2x2x1
jax: 0.10.0
libtpu: 0.0.40
codegen_flags: <defaults>
</compile_context>

<pallas_src>
import math

import jax
import jax.numpy as jnp
from jax.experimental import pallas as pl
from jax.experimental.pallas import tpu as pltpu


def affine_constant_flow_kernel(x_ref, a_ref, b_ref, z_ref):
    # a_ref = exp(s), b_ref = t; both (1, L) f32 and VMEM-resident across the
    # whole grid (their index_map always returns block (0, 0)).
    x = x_ref[...].astype(jnp.float32)           # no-op for f32 inputs
    z_ref[...] = (x * a_ref[...] + b_ref[...]).astype(z_ref.dtype)


def _choose_block_rows(rows, row_bytes, sublane, target_tile_bytes, small_slab_bytes):
    """Pick a sublane-aligned batch-tile size from a VMEM byte budget."""
    slab_bytes = rows * row_bytes
    if slab_bytes <= small_slab_bytes or rows <= sublane:
        # Tiny problem: one full-array block, single grid step.
        return rows
    # ~target_tile_bytes per tile (pipeline holds ~4x that: 2 in + 2 out bufs).
    budget = max(sublane, (target_tile_bytes // row_bytes) // sublane * sublane)
    # Guarantee >= 2 grid steps so both v7x TensorCores get work.
    half = max(sublane, (rows // 2) // sublane * sublane)
    return min(rows, budget, half)


def affine_constant_flow_forward(x, s, t, *,
                                 target_tile_bytes=2 << 20,
                                 small_slab_bytes=1 << 20):
    """Forward pass of AffineConstantFlow.

    Args:
      x: (B, dim) input (f32 or bf16).
      s: (1, dim) log-scale parameter (zeros if scale=False).
      t: (1, dim) shift parameter (zeros if shift=False).

    Returns:
      z:       (B, dim), dtype of x
      log_det: (1,)  == sum(s, axis=1)
    """
    B, dim = x.shape
    assert s.shape == (1, dim) and t.shape == (1, dim)

    # Parameter-only quantities: computed once in the wrapper, not per tile.
    log_det = jnp.sum(s, axis=1)                     # (1,), batch-independent
    exp_s = jnp.exp(s.astype(jnp.float32))           # (1, dim)
    t32 = t.astype(jnp.float32)

    elem_bytes = jnp.dtype(x.dtype).itemsize
    sublane = 8 * max(1, 4 // elem_bytes)            # 8 for f32, 16 for bf16
    total = B * dim

    # --- Choose a lane-dense 2-D slab layout when dim is not a multiple of 128.
    reshaped = False
    if dim % 128 == 0:
        slab, a, b = x, exp_s, t32
        rows, L = B, dim
    else:
        lane = (dim * 128) // math.gcd(dim, 128)     # lcm(dim, 128)
        while lane < 512 and total % (2 * lane) == 0:
            lane *= 2                                # grow toward ~512 lanes
        if total % lane == 0 and lane * elem_bytes <= target_tile_bytes:
            rows, L = total // lane, lane
            slab = x.reshape(rows, L)                # row-major: free reshape
            reps = L // dim
            a = jnp.tile(exp_s, (1, reps))           # (1, L)
            b = jnp.tile(t32, (1, reps))             # (1, L)
            reshaped = True
        else:
            # Divisibility doesn't work out: lane-sparse but correct fallback
            # (last block dim == full array dim, so the (8,128) rule is satisfied).
            slab, a, b = x, exp_s, t32
            rows, L = B, dim

    row_bytes = L * elem_bytes
    block_rows = _choose_block_rows(rows, row_bytes, sublane,
                                    target_tile_bytes, small_slab_bytes)
    grid = (pl.cdiv(rows, block_rows),)

    z_slab = pl.pallas_call(
        affine_constant_flow_kernel,
        grid=grid,
        in_specs=[
            # x: one batch tile per grid step -> HBM<->VMEM software pipelining.
            pl.BlockSpec((block_rows, L), lambda i: (i, 0)),
            # exp(s), t: same block every step -> stay resident in VMEM.
            pl.BlockSpec((1, L), lambda i: (0, 0)),
            pl.BlockSpec((1, L), lambda i: (0, 0)),
        ],
        out_specs=pl.BlockSpec((block_rows, L), lambda i: (i, 0)),
        out_shape=jax.ShapeDtypeStruct((rows, L), x.dtype),
        compiler_params=pltpu.CompilerParams(
            dimension_semantics=("parallel",),       # megacore sharding on v7x
        ),
    )(slab, a, b)

    z = z_slab.reshape(B, dim) if reshaped else z_slab
    return z, log_det


def reference_forward(x, s, t):
    z = (x.astype(jnp.float32) * jnp.exp(s.astype(jnp.float32))
         + t.astype(jnp.float32)).astype(x.dtype)
    return z, jnp.sum(s, axis=1)


if __name__ == "__main__":
    key = jax.random.PRNGKey(0)
    kx, ks, kt = jax.random.split(key, 3)

    # Case 1: typical flow shape (dim=16 divides 128) -> lane-dense (rows, 512)
    # slab, single full-array block (tiny problem).
    B, dim = 64, 16
    x = jax.random.normal(kx, (B, dim), jnp.float32)
    s = jax.random.normal(ks, (1, dim), jnp.float32)   # scale=True
    t = jax.random.normal(kt, (1, dim), jnp.float32)   # shift=True
    z, log_det = affine_constant_flow_forward(x, s, t)
    jax.block_until_ready((z, log_det))
    z_r, ld_r = reference_forward(x, s, t)
    assert z.shape == (B, dim) and log_det.shape == (1,)
    assert jnp.allclose(z, z_r, atol=1e-5, rtol=1e-5)
    assert jnp.allclose(log_det, ld_r, atol=1e-5, rtol=1e-5)

    # Case 2: force the multi-step pipelined grid (parallel batch axis,
    # VMEM-resident params across steps) by shrinking the byte budgets.
    B2, dim2 = 1024, 16
    x2 = jax.random.normal(kx, (B2, dim2), jnp.float32)
    z2, ld2 = affine_constant_flow_forward(x2, s, t,
                                           target_tile_bytes=16 * 1024,
                                           small_slab_bytes=0)
    jax.block_until_ready((z2, ld2))
    z2_r, ld2_r = reference_forward(x2, s, t)
    assert jnp.allclose(z2, z2_r, atol=1e-5, rtol=1e-5)
    assert jnp.allclose(ld2, ld2_r, atol=1e-5, rtol=1e-5)

    # Case 3: awkward shape (dim=5, B=7) -> lane-sparse full-array fallback path.
    B3, dim3 = 7, 5
    x3 = jax.random.normal(kx, (B3, dim3), jnp.float32)
    s3 = jax.random.normal(ks, (1, dim3), jnp.float32)
    t3 = jax.random.normal(kt, (1, dim3), jnp.float32)
    z3, ld3 = affine_constant_flow_forward(x3, s3, t3)
    jax.block_until_ready((z3, ld3))
    z3_r, ld3_r = reference_forward(x3, s3, t3)
    assert jnp.allclose(z3, z3_r, atol=1e-5, rtol=1e-5)
    assert jnp.allclose(ld3, ld3_r, atol=1e-5, rtol=1e-5)

    # Case 4: bf16 streaming of x/z, f32 compute in-kernel (mixed precision).
    x4 = jax.random.normal(kx, (B, dim), jnp.float32).astype(jnp.bfloat16)
    z4, ld4 = affine_constant_flow_forward(x4, s, t)
    jax.block_until_ready((z4, ld4))
    z4_r, ld4_r = reference_forward(x4, s, t)
    assert z4.dtype == jnp.bfloat16
    assert jnp.allclose(z4.astype(jnp.float32), z4_r.astype(jnp.float32),
                        atol=2e-2, rtol=2e-2)
    assert jnp.allclose(ld4, ld4_r, atol=1e-5, rtol=1e-5)

    print("KERNEL_OK")
</pallas_src>

<mosaic_0001>
module attributes {stable_mosaic.version = 11 : i64} {
  func.func @affine_constant_flow_kernel(%arg0: i32, %arg1: memref<2x512xf32, #tpu.memory_space<vmem>>, %arg2: memref<1x512xf32, #tpu.memory_space<vmem>>, %arg3: memref<1x512xf32, #tpu.memory_space<vmem>>, %arg4: memref<2x512xf32, #tpu.memory_space<vmem>>) attributes {dimension_semantics = [#tpu.dimension_semantics<parallel>], iteration_bounds = array<i64: 1>, scalar_prefetch = 0 : i64, scratch_operands = 0 : i64, tpu.core_type = #tpu.core_type<tc>, window_params = [{transform_indices = @transform_0, window_bounds = array<i64: 2, 512>}, {pipeline_mode = #tpu.pipeline_mode<synchronous>, transform_indices = @transform_1, window_bounds = array<i64: 1, 512>}, {pipeline_mode = #tpu.pipeline_mode<synchronous>, transform_indices = @transform_2, window_bounds = array<i64: 1, 512>}, {transform_indices = @transform_3, window_bounds = array<i64: 2, 512>}]} {
    %c0 = arith.constant 0 : index
    %c0_0 = arith.constant 0 : index
    %0 = vector.load %arg1[%c0, %c0_0] : memref<2x512xf32, #tpu.memory_space<vmem>>, vector<2x512xf32>
    %c0_1 = arith.constant 0 : index
    %c0_2 = arith.constant 0 : index
    %1 = vector.load %arg2[%c0_1, %c0_2] : memref<1x512xf32, #tpu.memory_space<vmem>>, vector<1x512xf32>
    %2 = vector.broadcast %1 : vector<1x512xf32> to vector<2x512xf32>
    %3 = arith.mulf %0, %2 : vector<2x512xf32>
    %c0_3 = arith.constant 0 : index
    %c0_4 = arith.constant 0 : index
    %4 = vector.load %arg3[%c0_3, %c0_4] : memref<1x512xf32, #tpu.memory_space<vmem>>, vector<1x512xf32>
    %5 = vector.broadcast %4 : vector<1x512xf32> to vector<2x512xf32>
    %6 = arith.addf %3, %5 : vector<2x512xf32>
    %c0_5 = arith.constant 0 : index
    %c0_6 = arith.constant 0 : index
    %7 = vector.load %arg4[%c0_5, %c0_6] : memref<2x512xf32, #tpu.memory_space<vmem>>, vector<2x512xf32>
    tpu.vector_store %arg4[%c0_5, %c0_6], %6 {strides = array<i32>} : memref<2x512xf32, #tpu.memory_space<vmem>>, vector<2x512xf32>,
    return
  }
  func.func @transform_0(%arg0: i32) -> (i32, i32) {
    %c0_i32 = arith.constant 0 : i32
    %c0_i32_0 = arith.constant 0 : i32
    return %arg0, %c0_i32 : i32, i32
  }
  func.func @transform_1(%arg0: i32) -> (i32, i32) {
    %c0_i32 = arith.constant 0 : i32
    %c0_i32_0 = arith.constant 0 : i32
    %c0_i32_1 = arith.constant 0 : i32
    return %c0_i32, %c0_i32_0 : i32, i32
  }
  func.func @transform_2(%arg0: i32) -> (i32, i32) {
    %c0_i32 = arith.constant 0 : i32
    %c0_i32_0 = arith.constant 0 : i32
    %c0_i32_1 = arith.constant 0 : i32
    return %c0_i32, %c0_i32_0 : i32, i32
  }
  func.func @transform_3(%arg0: i32) -> (i32, i32) {
    %c0_i32 = arith.constant 0 : i32
    %c0_i32_0 = arith.constant 0 : i32
    return %arg0, %c0_i32 : i32, i32
  }
}

</mosaic_0001>

<llo_original>
// kernel: tpu_custom_call.1
$region0: #{tpu_custom_call.1}
  #allocation0 [shape = 'u32[]', space=smem, size = 0x4, offset = 0x4, fixed_abs, tag = 'smem constant byte address 0x4 - core index']
  #allocation1 [shape = 'u32[144,128]{1,0:T(1,128)}', space=vmem, size = 0x12000, scoped, tag = 'internal scratch']
  %s0 = inlined_call_operand.hbm [shape: f32[2,512], index: 0, kind: input, shape index: {}]
  %s1 = inlined_call_operand.hbm [shape: f32[1,512], index: 1, kind: input, shape index: {}]
  %s2 = inlined_call_operand.vmem [shape: f32[1,512], index: 2, kind: input, shape index: {}]
  %s3 = inlined_call_operand.hbm [shape: f32[2,512], index: 3, kind: output, shape index: {}]
  %s4 = sld [smem:[#allocation0]]
  $region30: #{tpu_custom_call.1} parent=0
    _
  %s6 = ssub.s32 1, %s4
  %s7 = scalar_select 0, %s6, %s4
  $region1: #{tpu_custom_call.1} parent=0
    #allocation2 [shape = 'u8[4096]{0}', space=vmem, size = 0x1000, scoped, tag = 'input window, operand 0, single buffered']
    #allocation3 [shape = 's32[1]{0}', space=sflag, size = 0x4, scoped, tag = 'scoped memory for tpu_custom_call.1']
    #allocation4 [shape = 's32[1]{0}', space=sflag, size = 0x4, scoped, tag = 'scoped memory for tpu_custom_call.1']
    #allocation5 [shape = 'u8[2048]{0}', space=vmem, size = 0x800, scoped, tag = 'input window, operand 1, single buffered']
    #allocation6 [shape = 's32[1]{0}', space=sflag, size = 0x4, scoped, tag = 'scoped memory for tpu_custom_call.1']
    #allocation7 [shape = 'u8[4096]{0}', space=vmem, size = 0x1000, scoped, tag = 'output window, operand 0, single buffered']
    %8 = vsyncpa [#allocation3], 0
    %9 = vsyncpa [#allocation6], 0
    %10 = vsyncpa [#allocation4], 0
    // Predicated region
    $region2: #{tpu_custom_call.1} parent=1 // pred_check
      _
    $region3: #{tpu_custom_call.1} parent=1 // pred_check_branch
      %12 = sbr.rel (0) target = $region5
    $region4: #{tpu_custom_call.1} parent=1 // pred_region
      %s14 = ssub.s32 128, 128
      %15 = vsyncadd [#allocation3], %s14
      %s17 = sshll.u32 [#allocation2], 4
      %s18 = int_to_ptr.vmem [resolvable:$true] %s17
      %20 = dma.hbm_to_vmem [thread:$0]  %s0, 128, %s18, [#allocation3]
    $region5: #{tpu_custom_call.1} parent=1 // pred_fallthru
      _
    // Predicated region
    $region6: #{tpu_custom_call.1} parent=1 // pred_check
      _
    $region7: #{tpu_custom_call.1} parent=1 // pred_check_branch
      %22 = sbr.rel (0) target = $region9
    $region8: #{tpu_custom_call.1} parent=1 // pred_region
      %s24 = ssub.s32 64, 64
      %25 = vsyncadd [#allocation6], %s24
      %s27 = sshll.u32 [#allocation5], 4
      %s28 = int_to_ptr.vmem [resolvable:$true] %s27
      %30 = dma.hbm_to_vmem [thread:$0]  %s1, 64, %s28, [#allocation6]
    $region9: #{tpu_custom_call.1} parent=1 // pred_fallthru
      _
    // Predicated region
    $region10: #{tpu_custom_call.1} parent=1 // pred_check
      _
    $region11: #{tpu_custom_call.1} parent=1 // pred_check_branch
      %32 = sbr.rel (0) target = $region13
    $region12: #{tpu_custom_call.1} parent=1 // pred_region
      _
    $region13: #{tpu_custom_call.1} parent=1 // pred_fallthru
      _
    // Predicated region
    $region14: #{tpu_custom_call.1} parent=1 // pred_check
      _
    $region15: #{tpu_custom_call.1} parent=1 // pred_check_branch
      %34 = sbr.rel (0) target = $region17
    $region16: #{tpu_custom_call.1} parent=1 // pred_region
      %35 = dma.done [#allocation3], 128
    $region17: #{tpu_custom_call.1} parent=1 // pred_fallthru
      _
    // Predicated region
    $region18: #{tpu_custom_call.1} parent=1 // pred_check
      _
    $region19: #{tpu_custom_call.1} parent=1 // pred_check_branch
      %37 = sbr.rel (0) target = $region21
    $region20: #{tpu_custom_call.1} parent=1 // pred_region
      %38 = dma.done [#allocation6], 64
    $region21: #{tpu_custom_call.1} parent=1 // pred_fallthru
      _
    %v39 = vld [vmem:[#allocation2] sm:$0xff]
    %v40 = vld [vmem:[#allocation5] sm:$0xf]
    %v42 = vlaneseq
    %v43 = vshrl.u32 %v42, 7
    %v44 = vsub.s32 0, %v43
    %v45 = vrot.slane %v40, %v44
    %v46 = vlaneseq
    %v47 = vshrl.u32 %v46, 7
    %v48 = vsub.s32 1, %v47
    %v49 = vrot.slane %v40, %v48
    %v50 = vlaneseq
    %v51 = vshrl.u32 %v50, 7
    %v52 = vsub.s32 2, %v51
    %v53 = vrot.slane %v40, %v52
    %v54 = vlaneseq
    %v55 = vshrl.u32 %v54, 7
    %v56 = vsub.s32 3, %v55
    %v57 = vrot.slane %v40, %v56
    %v58 = vcombine.low %v45, %v49
    %v59 = vcombine.low %v53, %v57
    %v61 = vunpack.c.l.s4 1983009808
    %v62 = vunpack.c.0.s8 %v61
    %v63 = vlaneseq
    %v64 = vshrl.u32 %v63, 7
    %v65 = vsub.s32 %v62, %v64
    %v66 = vrot.slane %v58, %v65
    %v68 = vunpack.c.l.s4 1983009808
    %v69 = vunpack.c.0.s8 %v68
    %v70 = vlaneseq
    %v71 = vshrl.u32 %v70, 7
    %v72 = vsub.s32 %v69, %v71
    %v73 = vrot.slane %v59, %v72
    %v74 = vcombine.low %v66, %v73
    %v76 = vmul.f32 %v39, %v74
    %v77 = vld [vmem:[%s2] sm:$0xf]
    %v79 = vlaneseq
    %v80 = vshrl.u32 %v79, 7
    %v81 = vsub.s32 0, %v80
    %v82 = vrot.slane %v77, %v81
    %v83 = vlaneseq
    %v84 = vshrl.u32 %v83, 7
    %v85 = vsub.s32 1, %v84
    %v86 = vrot.slane %v77, %v85
    %v87 = vlaneseq
    %v88 = vshrl.u32 %v87, 7
    %v89 = vsub.s32 2, %v88
    %v90 = vrot.slane %v77, %v89
    %v91 = vlaneseq
    %v92 = vshrl.u32 %v91, 7
    %v93 = vsub.s32 3, %v92
    %v94 = vrot.slane %v77, %v93
    %v95 = vcombine.low %v82, %v86
    %v96 = vcombine.low %v90, %v94
    %v98 = vunpack.c.l.s4 1983009808
    %v99 = vunpack.c.0.s8 %v98
    %v100 = vlaneseq
    %v101 = vshrl.u32 %v100, 7
    %v102 = vsub.s32 %v99, %v101
    %v103 = vrot.slane %v95, %v102
    %v105 = vunpack.c.l.s4 1983009808
    %v106 = vunpack.c.0.s8 %v105
    %v107 = vlaneseq
    %v108 = vshrl.u32 %v107, 7
    %v109 = vsub.s32 %v106, %v108
    %v110 = vrot.slane %v96, %v109
    %v111 = vcombine.low %v103, %v110
    %v113 = vadd.f32 %v76, %v111
    %114 = vst [vmem:[#allocation7] sm:$0xff] %v113
    // Predicated region
    $region22: #{tpu_custom_call.1} parent=1 // pred_check
      _
    $region23: #{tpu_custom_call.1} parent=1 // pred_check_branch
      %116 = sbr.rel (0) target = $region25
    $region24: #{tpu_custom_call.1} parent=1 // pred_region
      %s118 = ssub.s32 128, 128
      %119 = vsyncadd [#allocation4], %s118
      %s121 = sshll.u32 [#allocation7], 4
      %s122 = int_to_ptr.vmem [resolvable:$true] %s121
      %124 = dma.vmem_to_hbm [thread:$0]  %s122, 128, %s3, [#allocation4]
    $region25: #{tpu_custom_call.1} parent=1 // pred_fallthru
      _
    // Predicated region
    $region26: #{tpu_custom_call.1} parent=1 // pred_check
      _
    $region27: #{tpu_custom_call.1} parent=1 // pred_check_branch
      %126 = sbr.rel (0) target = $region29
    $region28: #{tpu_custom_call.1} parent=1 // pred_region
      %127 = dma.done [#allocation4], 128
    $region29: #{tpu_custom_call.1} parent=1 // pred_fallthru
      _
    %128 = vsyncpa [#allocation3], 1
    %129 = vsyncpa [#allocation6], 1
    %130 = vsyncpa [#allocation4], 1

</llo_original>
